<compile_context>
chip_gen: v6e
topology: v6e:2x2x1
jax: 0.10.0
libtpu: 0.0.40
codegen_flags: <defaults>
</compile_context>

<pallas_src>
import functools

import jax
import jax.numpy as jnp
from jax import lax
from jax.experimental import pallas as pl
from jax.experimental.pallas import tpu as pltpu

LANE = 128


# -----------------------------------------------------------------------------
# small helpers (wrapper side)
# -----------------------------------------------------------------------------
def _round_up(n, m):
    return (n + m - 1) // m * m


def _pad_axis(a, target, axis):
    pad = target - a.shape[axis]
    if pad <= 0:
        return a
    widths = [(0, 0)] * a.ndim
    widths[axis] = (0, pad)
    return jnp.pad(a, widths)


def _group_maps(c_real, c_pad, groups):
    """Channel->group membership matrices; padded channels belong to no group."""
    cg = c_real // groups
    chan = jnp.arange(c_pad)
    member = (chan[:, None] // cg == jnp.arange(groups)[None, :]) & (chan[:, None] < c_real)
    mcg = member.astype(jnp.float32)          # (c_pad, G)
    return mcg, mcg.T                         # (c_pad, G), (G, c_pad)


def nchw_to_flat(x_nchw, c_pad):
    """NCHW -> kernel-native (B, H*W, c_pad) lane-dense layout."""
    B, C, H, W = x_nchw.shape
    x = jnp.transpose(x_nchw, (0, 2, 3, 1)).reshape(B, H * W, C)
    return _pad_axis(x, c_pad, 2)


def flat_to_nchw(x_flat, C, H, W):
    B = x_flat.shape[0]
    x = x_flat[:, :, :C].reshape(B, H, W, C)
    return jnp.transpose(x, (0, 3, 1, 2))


# -----------------------------------------------------------------------------
# in-kernel helpers
# -----------------------------------------------------------------------------
def _swish(y):
    """x * sigmoid(x); the divide goes to the EUP (approx reciprocal), not the VALU."""
    return y * pl.reciprocal(1.0 + jnp.exp(-y), approx=True)


def _group_norm_flat(x, gamma, beta, mcg, mgc, denom, eps):
    """GroupNorm on a flat (HW, Cp) f32 slab.  Group stats via membership matmuls (f32)."""
    s = jnp.sum(x, axis=0, keepdims=True)                                     # (1, Cp)
    gmu = jnp.dot(s, mcg, preferred_element_type=jnp.float32) / denom         # (1, G)
    mu = jnp.dot(gmu, mgc, preferred_element_type=jnp.float32)                # (1, Cp)
    xc = x - mu
    ss = jnp.sum(xc * xc, axis=0, keepdims=True)                              # (1, Cp)
    gvar = jnp.dot(ss, mcg, preferred_element_type=jnp.float32) / denom       # (1, G)
    var = jnp.dot(gvar, mgc, preferred_element_type=jnp.float32)              # (1, Cp)
    return xc * lax.rsqrt(var + eps) * gamma + beta


def _make_tap_masks(H, W):
    """9 per-tap boundary masks, built once per kernel call (shared by both 3x3 convs)."""
    hw = H * W
    idx = lax.broadcasted_iota(jnp.int32, (hw, 1), 0)
    # Row masks need no integer divide on the flat index.
    top = idx >= W                      # source row i-1 exists
    bot = idx < (H - 1) * W             # source row i+1 exists
    # Column index: power-of-two W avoids an integer divide on the VPU.
    if W & (W - 1) == 0:
        wpos = jnp.bitwise_and(idx, W - 1)
    else:
        wpos = idx % W
    left = wpos >= 1                    # source col j-1 exists
    right = wpos <= W - 2               # source col j+1 exists
    rows = (top, None, bot)             # dy = -1, 0, +1
    cols = (left, None, right)          # dx = -1, 0, +1
    masks = []
    for mr in rows:
        cur = []
        for mc in cols:
            if mr is None and mc is None:
                cur.append(None)
            elif mr is None:
                cur.append(mc)
            elif mc is None:
                cur.append(mr)
            else:
                cur.append(jnp.logical_and(mr, mc))
        masks.append(cur)
    return masks


def _conv3x3_taps(y, w_ref, masks, W):
    """3x3 'same' conv on a flat (HW, Cin_p) f32 slab -> (HW, Cout_p) f32.

    Each tap is a pltpu.roll row-shift (XLU) + precomputed boundary mask (VPU); the tap is
    cast to bf16 at the MXU boundary and accumulated in f32.
    """
    hw = y.shape[0]
    cout = w_ref.shape[-1]
    acc = jnp.zeros((hw, cout), jnp.float32)
    for ky in range(3):
        dy = ky - 1
        for kx in range(3):
            dx = kx - 1
            shift = (-(dy * W + dx)) % hw            # tap[n] = y[n + dy*W + dx]
            tap = y if shift == 0 else pltpu.roll(y, shift=shift, axis=0)
            m = masks[ky][kx]
            if m is not None:
                tap = jnp.where(m, tap, 0.0)         # (HW,1) mask broadcast over lanes
            acc = acc + jnp.dot(tap.astype(jnp.bfloat16), w_ref[ky, kx],
                                preferred_element_type=jnp.float32)
    return acc


# -----------------------------------------------------------------------------
# Fused ResnetBlock kernel:
#   h   = Conv3x3(Swish(GN(x)))  + b1 + Conv1x1(t)[broadcast over W] + bn   (block1 + noise_func)
#   out = Conv3x3(Swish(GN(h)))  + b2 + res_conv(x)                         (block2 + residual)
# One grid step = one batch element.
# -----------------------------------------------------------------------------
def _resnet_block_kernel(*refs, H, W, n1, n2, eps, has_res):
    if has_res:
        (x_ref, t_ref,
         g1_ref, be1_ref, w1_ref, b1_ref,
         wn_ref, bn_ref,
         g2_ref, be2_ref, w2_ref, b2_ref,
         mcg1_ref, mgc1_ref, mcg2_ref, mgc2_ref,
         wr_ref, br_ref, o_ref) = refs
    else:
        (x_ref, t_ref,
         g1_ref, be1_ref, w1_ref, b1_ref,
         wn_ref, bn_ref,
         g2_ref, be2_ref, w2_ref, b2_ref,
         mcg1_ref, mgc1_ref, mcg2_ref, mgc2_ref,
         o_ref) = refs

    hw = H * W
    x = x_ref[0].astype(jnp.float32)                    # (HW, Cin_p)
    masks = _make_tap_masks(H, W)                       # built once, shared by both convs

    # ---- block1: GroupNorm (f32 stats) ----
    y = _group_norm_flat(x, g1_ref[...], be1_ref[...], mcg1_ref[...], mgc1_ref[...], n1, eps)

    # ---- residual hoisted to x's last use so the (HW, Cin_p) x slab can die early ----
    if has_res:
        res = jnp.dot(x.astype(jnp.bfloat16), wr_ref[...],
                      preferred_element_type=jnp.float32) + br_ref[...]
    else:
        res = x

    # ---- block1: Swish -> Conv3x3 ----
    y = _swish(y)
    h = _conv3x3_taps(y, w1_ref, masks, W) + b1_ref[...]

    # ---- + noise_func(time_emb): 1x1 conv on H rows only, broadcast over W ----
    noise = jnp.dot(t_ref[0].astype(jnp.bfloat16), wn_ref[...],
                    preferred_element_type=jnp.float32) + bn_ref[...]          # (H, Cout_p)
    cout_p = noise.shape[-1]
    h = (h.reshape(H, W, cout_p) + noise[:, None, :]).reshape(hw, cout_p)      # free view (W%8==0)

    # ---- block2 (dropout == 0 -> Identity): GroupNorm -> Swish -> Conv3x3 ----
    y2 = _swish(_group_norm_flat(h, g2_ref[...], be2_ref[...],
                                 mcg2_ref[...], mgc2_ref[...], n2, eps))
    out = _conv3x3_taps(y2, w2_ref, masks, W) + b2_ref[...]

    # ---- + residual (1x1 conv or identity) ----
    o_ref[0] = (out + res).astype(o_ref.dtype)


# -----------------------------------------------------------------------------
# wrapper: one-time parameter prep + the pallas_call
# -----------------------------------------------------------------------------
def prepare_resnet_params(p, norm_groups):
    """Pad to lane-dense widths and pre-cast matmul weights to bf16 (call ONCE, not per step)."""
    Cin, Cout = p["w1"].shape[2], p["w1"].shape[3]
    Ct = p["wn"].shape[0]
    assert Cin % norm_groups == 0 and Cout % norm_groups == 0
    cin_p, ct_p, cout_p = (_round_up(c, LANE) for c in (Cin, Ct, Cout))
    bf = jnp.bfloat16
    mcg1, mgc1 = _group_maps(Cin, cin_p, norm_groups)
    mcg2, mgc2 = _group_maps(Cout, cout_p, norm_groups)
    prm = {
        "Cin": Cin, "Cout": Cout, "Ct": Ct,
        "cin_p": cin_p, "ct_p": ct_p, "cout_p": cout_p,
        "groups": norm_groups, "has_res": "wr" in p,
        "w1": _pad_axis(_pad_axis(p["w1"], cin_p, 2), cout_p, 3).astype(bf),   # (3,3,cin_p,cout_p)
        "w2": _pad_axis(_pad_axis(p["w2"], cout_p, 2), cout_p, 3).astype(bf),
        "wn": _pad_axis(_pad_axis(p["wn"], ct_p, 0), cout_p, 1).astype(bf),
        "g1": _pad_axis(p["g1"].reshape(1, -1), cin_p, 1),
        "be1": _pad_axis(p["be1"].reshape(1, -1), cin_p, 1),
        "b1": _pad_axis(p["b1"].reshape(1, -1), cout_p, 1),
        "bn": _pad_axis(p["bn"].reshape(1, -1), cout_p, 1),
        "g2": _pad_axis(p["g2"].reshape(1, -1), cout_p, 1),
        "be2": _pad_axis(p["be2"].reshape(1, -1), cout_p, 1),
        "b2": _pad_axis(p["b2"].reshape(1, -1), cout_p, 1),
        "mcg1": mcg1, "mgc1": mgc1, "mcg2": mcg2, "mgc2": mgc2,
    }
    if prm["has_res"]:
        prm["wr"] = _pad_axis(_pad_axis(p["wr"], cin_p, 0), cout_p, 1).astype(bf)
        prm["br"] = _pad_axis(p["br"].reshape(1, -1), cout_p, 1)
    return prm


def resnet_block_apply(x_flat, t_bnc, prm, H, W, eps=1e-5):
    """ResnetBlock.forward in the kernel-native layout.

    x_flat: (B, H*W, cin_p) channel-padded flat activations (f32 or bf16).
    t_bnc:  (B, H, Ct) noise embedding (NOT broadcast over W; it broadcasts in-kernel).
    Returns (B, H*W, cout_p) bf16 in the same flat layout (chain blocks in this layout).
    """
    B, hw, cin_p = x_flat.shape
    assert hw == H * W and cin_p == prm["cin_p"]
    groups = prm["groups"]
    ct_p, cout_p = prm["ct_p"], prm["cout_p"]
    has_res = prm["has_res"]
    Cin, Cout = prm["Cin"], prm["Cout"]

    t_p = _pad_axis(t_bnc, ct_p, 2)                          # (B, H, ct_p)

    def cspec(shape):
        # constant-index operand: single-buffer it (its block never changes across the grid)
        nd = len(shape)
        return pl.BlockSpec(shape, lambda b, nd=nd: (0,) * nd,
                            pipeline_mode=pl.Buffered(1))

    args = [x_flat, t_p,
            prm["g1"], prm["be1"], prm["w1"], prm["b1"],
            prm["wn"], prm["bn"],
            prm["g2"], prm["be2"], prm["w2"], prm["b2"],
            prm["mcg1"], prm["mgc1"], prm["mcg2"], prm["mgc2"]]
    in_specs = [
        pl.BlockSpec((1, hw, cin_p), lambda b: (b, 0, 0)),
        pl.BlockSpec((1, H, ct_p), lambda b: (b, 0, 0)),
        cspec((1, cin_p)), cspec((1, cin_p)),
        cspec((3, 3, cin_p, cout_p)), cspec((1, cout_p)),
        cspec((ct_p, cout_p)), cspec((1, cout_p)),
        cspec((1, cout_p)), cspec((1, cout_p)),
        cspec((3, 3, cout_p, cout_p)), cspec((1, cout_p)),
        cspec((cin_p, groups)), cspec((groups, cin_p)),
        cspec((cout_p, groups)), cspec((groups, cout_p)),
    ]
    if has_res:
        args += [prm["wr"], prm["br"]]
        in_specs += [cspec((cin_p, cout_p)), cspec((1, cout_p))]

    kernel = functools.partial(
        _resnet_block_kernel, H=H, W=W,
        n1=float(hw * (Cin // groups)), n2=float(hw * (Cout // groups)),
        eps=eps, has_res=has_res)

    flops = B * (18 * hw * cin_p * cout_p            # block1 3x3 conv
                 + 18 * hw * cout_p * cout_p         # block2 3x3 conv
                 + 2 * H * ct_p * cout_p             # noise 1x1 conv
                 + (2 * hw * cin_p * cout_p if has_res else 0))
    bytes_accessed = int(sum(a.size * a.dtype.itemsize for a in args) + B * hw * cout_p * 2)
    cost = pl.CostEstimate(flops=int(flops),
                           transcendentals=int(2 * B * hw * (cin_p + cout_p)),
                           bytes_accessed=bytes_accessed)

    return pl.pallas_call(
        kernel,
        out_shape=jax.ShapeDtypeStruct((B, hw, cout_p), jnp.bfloat16),
        grid=(B,),
        in_specs=in_specs,
        out_specs=pl.BlockSpec((1, hw, cout_p), lambda b: (b, 0, 0)),
        compiler_params=pltpu.CompilerParams(
            dimension_semantics=("parallel",),           # megacore split over batch (v7x)
            vmem_limit_bytes=64 * 1024 * 1024),
        cost_estimate=cost,
    )(*args)


# -----------------------------------------------------------------------------
# noise_level_mlp: PositionalEncoding (plain JAX) -> fused [1x1 conv, Swish] x2 kernel
# -----------------------------------------------------------------------------
def _noise_mlp_kernel(pe_ref, w1_ref, b1_ref, w2_ref, b2_ref, o_ref):
    h = jnp.dot(pe_ref[...].astype(jnp.bfloat16), w1_ref[...],
                preferred_element_type=jnp.float32) + b1_ref[...]
    h = _swish(h)
    t = jnp.dot(h.astype(jnp.bfloat16), w2_ref[...],
                preferred_element_type=jnp.float32) + b2_ref[...]
    o_ref[...] = _swish(t).astype(o_ref.dtype)


def noise_level_mlp(noise_level, p):
    """noise_level: (B, 1, N, 1) -> t: (B, N, C_noise) (kernel-native row layout, f32)."""
    B, _, N, _ = noise_level.shape
    cn = p["wm2"].shape[-1]
    chid = p["wm1"].shape[-1]
    half = cn // 2

    # PositionalEncoding (elementwise sin/cos, plain JAX)
    step = jnp.arange(half, dtype=jnp.float32)
    emb = 1.0e7 * 10.0 ** (-step * 4.0 / half)
    enc = noise_level[:, 0, :, 0][..., None] * emb                      # (B, N, half)
    pe = jnp.concatenate([jnp.sin(enc), jnp.cos(enc)], axis=-1)         # (B, N, cn)

    rows = B * N
    rows_p = _round_up(rows, 8)
    pe2d = _pad_axis(pe.reshape(rows, cn), rows_p, 0)

    out = pl.pallas_call(
        _noise_mlp_kernel,
        out_shape=jax.ShapeDtypeStruct((rows_p, cn), jnp.float32),
        grid=(1,),
        in_specs=[
            pl.BlockSpec((rows_p, cn), lambda i: (0, 0)),
            pl.BlockSpec((cn, chid), lambda i: (0, 0)),
            pl.BlockSpec((1, chid), lambda i: (0, 0)),
            pl.BlockSpec((chid, cn), lambda i: (0, 0)),
            pl.BlockSpec((1, cn), lambda i: (0, 0)),
        ],
        out_specs=pl.BlockSpec((rows_p, cn), lambda i: (0, 0)),
    )(pe2d, p["wm1"].astype(jnp.bfloat16), p["bm1"].reshape(1, chid),
      p["wm2"].astype(jnp.bfloat16), p["bm2"].reshape(1, cn))

    return out[:rows].reshape(B, N, cn)


# -----------------------------------------------------------------------------
# parameter init (f32 masters; padding/bf16 cast happens once in prepare_resnet_params)
# -----------------------------------------------------------------------------
def init_params(key, dim, dim_out, noise_ch):
    noise_hidden = noise_ch * 4
    ks = jax.random.split(key, 16)
    nrm = lambda k, shape, s: s * jax.random.normal(k, shape, jnp.float32)
    p = {
        # noise_level_mlp: Conv1x1(128->512) -> Swish -> Conv1x1(512->128) -> Swish
        "wm1": nrm(ks[0], (noise_ch, noise_hidden), 0.05),
        "bm1": nrm(ks[1], (noise_hidden,), 0.01),
        "wm2": nrm(ks[2], (noise_hidden, noise_ch), 0.05),
        "bm2": nrm(ks[3], (noise_ch,), 0.01),
        # block1: GroupNorm(groups, dim) + Conv2d(dim, dim_out, 3, padding=1)   (HWIO)
        "g1": 1.0 + nrm(ks[4], (dim,), 0.1),
        "be1": nrm(ks[5], (dim,), 0.1),
        "w1": nrm(ks[6], (3, 3, dim, dim_out), 0.05),
        "b1": nrm(ks[7], (dim_out,), 0.01),
        # noise_func: Conv2d(noise_ch, dim_out, 1)
        "wn": nrm(ks[8], (noise_ch, dim_out), 0.05),
        "bn": nrm(ks[9], (dim_out,), 0.01),
        # block2: GroupNorm(groups, dim_out) + Conv2d(dim_out, dim_out, 3, padding=1)
        "g2": 1.0 + nrm(ks[10], (dim_out,), 0.1),
        "be2": nrm(ks[11], (dim_out,), 0.1),
        "w2": nrm(ks[12], (3, 3, dim_out, dim_out), 0.05),
        "b2": nrm(ks[13], (dim_out,), 0.01),
    }
    if dim != dim_out:
        # res_conv: Conv2d(dim, dim_out, 1)
        p["wr"] = nrm(ks[14], (dim, dim_out), 0.05)
        p["br"] = nrm(ks[15], (dim_out,), 0.01)
    return p


# -----------------------------------------------------------------------------
# pure-JAX/XLA reference (f32) for a sanity check
# -----------------------------------------------------------------------------
def _swish_ref(x):
    return x * jax.nn.sigmoid(x)


def _gn_ref(x, gamma, beta, groups, eps=1e-5):
    B, H, W, C = x.shape
    xg = x.reshape(B, H, W, groups, C // groups)
    mu = jnp.mean(xg, axis=(1, 2, 4), keepdims=True)
    var = jnp.mean((xg - mu) ** 2, axis=(1, 2, 4), keepdims=True)
    xn = ((xg - mu) / jnp.sqrt(var + eps)).reshape(B, H, W, C)
    return xn * gamma.reshape(1, 1, 1, C) + beta.reshape(1, 1, 1, C)


def _ref_forward(x_nchw, noise_level, p, groups):
    B, Cin, H, W = x_nchw.shape
    cn = p["wm2"].shape[-1]
    half = cn // 2
    step = jnp.arange(half, dtype=jnp.float32)
    emb = 1.0e7 * 10.0 ** (-step * 4.0 / half)
    enc = noise_level[:, 0, :, 0][..., None] * emb
    pe = jnp.concatenate([jnp.sin(enc), jnp.cos(enc)], axis=-1)
    t = _swish_ref(pe @ p["wm1"] + p["bm1"])
    t = _swish_ref(t @ p["wm2"] + p["bm2"])                             # (B, N, cn)
    t_nhwc = jnp.broadcast_to(t[:, :, None, :], (B, H, W, cn))

    x = jnp.transpose(x_nchw, (0, 2, 3, 1))

    def block(z, g, be, w, b):
        z = _swish_ref(_gn_ref(z, g, be, groups))
        z = lax.conv_general_dilated(z, w, (1, 1), "SAME",
                                     dimension_numbers=("NHWC", "HWIO", "NHWC"))
        return z + b.reshape(1, 1, 1, -1)

    noise = t_nhwc @ p["wn"] + p["bn"]
    h = block(x, p["g1"], p["be1"], p["w1"], p["b1"]) + noise
    h = block(h, p["g2"], p["be2"], p["w2"], p["b2"])
    res = (x @ p["wr"] + p["br"]) if "wr" in p else x
    return jnp.transpose(h + res, (0, 3, 1, 2))


# -----------------------------------------------------------------------------
if __name__ == "__main__":
    # One representative ResnetBlock of the UNet (inner_channel=32 -> 64, norm_groups=32,
    # noise_level_channel=128), driven by the module's noise_level_mlp.
    B, H, W = 2, 16, 16
    dim, dim_out = 32, 64
    noise_ch = 128
    norm_groups = 32

    key = jax.random.PRNGKey(0)
    kx, kn, kp = jax.random.split(key, 3)
    x = jax.random.normal(kx, (B, dim, H, W), jnp.float32)               # NCHW, like PyTorch
    noise_level = jax.random.uniform(kn, (B, 1, H, 1), jnp.float32, 0.01, 1.0)

    params = init_params(kp, dim, dim_out, noise_ch)

    # Padding / bf16 casting / membership-matrix construction happens ONCE.
    prm = prepare_resnet_params(params, norm_groups)

    # t = noise_level_mlp(noise_level): (B, N, 128).  In PyTorch the noise_func output
    # broadcasts over W when added to h, so t is never materialized at width W.
    t_bnc = noise_level_mlp(noise_level, params)

    # Kernel-native flat layout at the block boundary (chained blocks would stay in it).
    x_flat = nchw_to_flat(x, prm["cin_p"])
    out_flat = resnet_block_apply(x_flat, t_bnc, prm, H, W)
    out_flat = jax.block_until_ready(out_flat)
    assert out_flat.shape == (B, H * W, prm["cout_p"]) and out_flat.dtype == jnp.bfloat16

    out = flat_to_nchw(out_flat.astype(jnp.float32), dim_out, H, W)
    assert out.shape == (B, dim_out, H, W)
    assert bool(jnp.all(jnp.isfinite(out)))

    # sanity check against a pure-JAX f32 reference (loose tol: bf16 MXU inputs + bf16 output)
    ref = _ref_forward(x, noise_level, params, norm_groups)
    err = float(jnp.max(jnp.abs(out - ref)))
    tol = 5e-2 * (float(jnp.max(jnp.abs(ref))) + 1.0)
    assert err < tol, f"max abs err {err} exceeds tol {tol}"

    print("KERNEL_OK")
</pallas_src>

<mosaic_0001>
module attributes {stable_mosaic.version = 11 : i64} {
  func.func @_noise_mlp_kernel(%arg0: i32, %arg1: memref<32x128xf32, #tpu.memory_space<vmem>>, %arg2: memref<128x512xbf16, #tpu.memory_space<vmem>>, %arg3: memref<1x512xf32, #tpu.memory_space<vmem>>, %arg4: memref<512x128xbf16, #tpu.memory_space<vmem>>, %arg5: memref<1x128xf32, #tpu.memory_space<vmem>>, %arg6: memref<32x128xf32, #tpu.memory_space<vmem>>) attributes {dimension_semantics = [#tpu.dimension_semantics<arbitrary>], iteration_bounds = array<i64: 1>, scalar_prefetch = 0 : i64, scratch_operands = 0 : i64, tpu.core_type = #tpu.core_type<tc>, window_params = [{pipeline_mode = #tpu.pipeline_mode<synchronous>, transform_indices = @transform_0, window_bounds = array<i64: 32, 128>}, {pipeline_mode = #tpu.pipeline_mode<synchronous>, transform_indices = @transform_1, window_bounds = array<i64: 128, 512>}, {pipeline_mode = #tpu.pipeline_mode<synchronous>, transform_indices = @transform_2, window_bounds = array<i64: 1, 512>}, {pipeline_mode = #tpu.pipeline_mode<synchronous>, transform_indices = @transform_3, window_bounds = array<i64: 512, 128>}, {pipeline_mode = #tpu.pipeline_mode<synchronous>, transform_indices = @transform_4, window_bounds = array<i64: 1, 128>}, {pipeline_mode = #tpu.pipeline_mode<synchronous>, transform_indices = @transform_5, window_bounds = array<i64: 32, 128>}]} {
    %c0 = arith.constant 0 : index
    %c0_0 = arith.constant 0 : index
    %0 = vector.load %arg1[%c0, %c0_0] : memref<32x128xf32, #tpu.memory_space<vmem>>, vector<32x128xf32>
    %1 = arith.truncf %0 : vector<32x128xf32> to vector<32x128xbf16>
    %c0_1 = arith.constant 0 : index
    %c0_2 = arith.constant 0 : index
    %2 = vector.load %arg2[%c0_1, %c0_2] : memref<128x512xbf16, #tpu.memory_space<vmem>>, vector<128x512xbf16>
    %cst = arith.constant dense<0.000000e+00> : vector<32x512xf32>
    %3 = tpu.matmul %1, %2, %cst {dimension_numbers = #tpu.dot_dimension_numbers<[1], [0], [0], [1], [0, 0, 1, 1], [], []>} : vector<32x128xbf16>, vector<128x512xbf16>, vector<32x512xf32> -> vector<32x512xf32>
    %c0_3 = arith.constant 0 : index
    %c0_4 = arith.constant 0 : index
    %4 = vector.load %arg3[%c0_3, %c0_4] : memref<1x512xf32, #tpu.memory_space<vmem>>, vector<1x512xf32>
    %5 = vector.broadcast %4 : vector<1x512xf32> to vector<32x512xf32>
    %6 = arith.addf %3, %5 : vector<32x512xf32>
    %cst_5 = arith.constant 0.000000e+00 : f32
    %7 = vector.broadcast %cst_5 : f32 to vector<32x512xf32>
    %8 = arith.subf %7, %6 : vector<32x512xf32>
    %9 = math.exp %8 : vector<32x512xf32>
    %cst_6 = arith.constant 1.000000e+00 : f32
    %10 = vector.broadcast %cst_6 : f32 to vector<32x512xf32>
    %11 = arith.addf %10, %9 : vector<32x512xf32>
    %12 = tpu.reciprocal %11 {approx = true} : vector<32x512xf32> -> vector<32x512xf32>
    %13 = arith.mulf %6, %12 : vector<32x512xf32>
    %14 = arith.truncf %13 : vector<32x512xf32> to vector<32x512xbf16>
    %c0_7 = arith.constant 0 : index
    %c0_8 = arith.constant 0 : index
    %15 = vector.load %arg4[%c0_7, %c0_8] : memref<512x128xbf16, #tpu.memory_space<vmem>>, vector<512x128xbf16>
    %cst_9 = arith.constant dense<0.000000e+00> : vector<32x128xf32>
    %16 = tpu.matmul %14, %15, %cst_9 {dimension_numbers = #tpu.dot_dimension_numbers<[1], [0], [0], [1], [0, 0, 1, 1], [], []>} : vector<32x512xbf16>, vector<512x128xbf16>, vector<32x128xf32> -> vector<32x128xf32>
    %c0_10 = arith.constant 0 : index
    %c0_11 = arith.constant 0 : index
    %17 = vector.load %arg5[%c0_10, %c0_11] : memref<1x128xf32, #tpu.memory_space<vmem>>, vector<1x128xf32>
    %18 = vector.broadcast %17 : vector<1x128xf32> to vector<32x128xf32>
    %19 = arith.addf %16, %18 : vector<32x128xf32>
    %cst_12 = arith.constant 0.000000e+00 : f32
    %20 = vector.broadcast %cst_12 : f32 to vector<32x128xf32>
    %21 = arith.subf %20, %19 : vector<32x128xf32>
    %22 = math.exp %21 : vector<32x128xf32>
    %cst_13 = arith.constant 1.000000e+00 : f32
    %23 = vector.broadcast %cst_13 : f32 to vector<32x128xf32>
    %24 = arith.addf %23, %22 : vector<32x128xf32>
    %25 = tpu.reciprocal %24 {approx = true} : vector<32x128xf32> -> vector<32x128xf32>
    %26 = arith.mulf %19, %25 : vector<32x128xf32>
    %c0_14 = arith.constant 0 : index
    %c0_15 = arith.constant 0 : index
    %27 = vector.load %arg6[%c0_14, %c0_15] : memref<32x128xf32, #tpu.memory_space<vmem>>, vector<32x128xf32>
    tpu.vector_store %arg6[%c0_14, %c0_15], %26 {strides = array<i32>} : memref<32x128xf32, #tpu.memory_space<vmem>>, vector<32x128xf32>,
    return
  }
  func.func @transform_0(%arg0: i32) -> (i32, i32) {
    %c0_i32 = arith.constant 0 : i32
    %c0_i32_0 = arith.constant 0 : i32
    %c0_i32_1 = arith.constant 0 : i32
    return %c0_i32, %c0_i32_0 : i32, i32
  }
  func.func @transform_1(%arg0: i32) -> (i32, i32) {
    %c0_i32 = arith.constant 0 : i32
    %c0_i32_0 = arith.constant 0 : i32
    %c0_i32_1 = arith.constant 0 : i32
    return %c0_i32, %c0_i32_0 : i32, i32
  }
  func.func @transform_2(%arg0: i32) -> (i32, i32) {
    %c0_i32 = arith.constant 0 : i32
    %c0_i32_0 = arith.constant 0 : i32
    %c0_i32_1 = arith.constant 0 : i32
    return %c0_i32, %c0_i32_0 : i32, i32
  }
  func.func @transform_3(%arg0: i32) -> (i32, i32) {
    %c0_i32 = arith.constant 0 : i32
    %c0_i32_0 = arith.constant 0 : i32
    %c0_i32_1 = arith.constant 0 : i32
    return %c0_i32, %c0_i32_0 : i32, i32
  }
  func.func @transform_4(%arg0: i32) -> (i32, i32) {
    %c0_i32 = arith.constant 0 : i32
    %c0_i32_0 = arith.constant 0 : i32
    %c0_i32_1 = arith.constant 0 : i32
    return %c0_i32, %c0_i32_0 : i32, i32
  }
  func.func @transform_5(%arg0: i32) -> (i32, i32) {
    %c0_i32 = arith.constant 0 : i32
    %c0_i32_0 = arith.constant 0 : i32
    %c0_i32_1 = arith.constant 0 : i32
    return %c0_i32, %c0_i32_0 : i32, i32
  }
}

</mosaic_0001>

<llo_original>
// kernel: tpu_custom_call.1
$region0: #{tpu_custom_call.1}
  #allocation0 [shape = 'u32[]', space=smem, size = 0x4, offset = 0x4, fixed_abs, tag = 'smem constant byte address 0x4 - core index']
  #allocation1 [shape = 'u32[144,128]{1,0:T(1,128)}', space=vmem, size = 0x12000, scoped, tag = 'internal scratch']
  %s0 = inlined_call_operand.hbm [shape: f32[32,128], index: 0, kind: input, shape index: {}]
  %s1 = inlined_call_operand.hbm [shape: bf16[128,512], index: 1, kind: input, shape index: {}]
  %s2 = inlined_call_operand.hbm [shape: f32[1,512], index: 2, kind: input, shape index: {}]
  %s3 = inlined_call_operand.hbm [shape: bf16[512,128], index: 3, kind: input, shape index: {}]
  %s4 = inlined_call_operand.vmem [shape: f32[1,128], index: 4, kind: input, shape index: {}]
  %s5 = inlined_call_operand.hbm [shape: f32[32,128], index: 5, kind: output, shape index: {}]
  %s6 = sld [smem:[#allocation0]]
  $region46: #{tpu_custom_call.1} parent=0
    _
  %s8 = ssub.s32 1, %s6
  %s9 = scalar_select 0, %s8, %s6
  $region1: #{tpu_custom_call.1} parent=0
    #allocation2 [shape = 'u8[16384]{0}', space=vmem, size = 0x4000, scoped, tag = 'input window, operand 0, single buffered']
    #allocation3 [shape = 's32[1]{0}', space=sflag, size = 0x4, scoped, tag = 'scoped memory for tpu_custom_call.1']
    #allocation4 [shape = 's32[1]{0}', space=sflag, size = 0x4, scoped, tag = 'scoped memory for tpu_custom_call.1']
    #allocation5 [shape = 'u8[131072]{0}', space=vmem, size = 0x20000, scoped, tag = 'input window, operand 1, single buffered']
    #allocation6 [shape = 's32[1]{0}', space=sflag, size = 0x4, scoped, tag = 'scoped memory for tpu_custom_call.1']
    #allocation7 [shape = 'u8[2048]{0}', space=vmem, size = 0x800, scoped, tag = 'input window, operand 2, single buffered']
    #allocation8 [shape = 'u8[131072]{0}', space=vmem, size = 0x20000, scoped, tag = 'input window, operand 3, single buffered']
    #allocation9 [shape = 's32[1]{0}', space=sflag, size = 0x4, scoped, tag = 'scoped memory for tpu_custom_call.1']
    #allocation10 [shape = 'u8[16384]{0}', space=vmem, size = 0x4000, scoped, tag = 'output window, operand 0, single buffered']
    %10 = vsyncpa [#allocation3], 0
    %11 = vsyncpa [#allocation6], 0
    %12 = vsyncpa [#allocation9], 0
    %13 = vsyncpa [#allocation4], 0
    // Predicated region
    $region2: #{tpu_custom_call.1} parent=1 // pred_check
      _
    $region3: #{tpu_custom_call.1} parent=1 // pred_check_branch
      %15 = sbr.rel (0) target = $region5
    $region4: #{tpu_custom_call.1} parent=1 // pred_region
      %s17 = ssub.s32 512, 512
      %18 = vsyncadd [#allocation3], %s17
      %s19 = sshll.u32 [#allocation2], 4
      %s20 = int_to_ptr.vmem [resolvable:$true] %s19
      %25 = dma.hbm_to_vmem [thread:$0]  %s0, 512, %s20, [#allocation3], 128, 128, 8
    $region5: #{tpu_custom_call.1} parent=1 // pred_fallthru
      _
    // Predicated region
    $region6: #{tpu_custom_call.1} parent=1 // pred_check
      _
    $region7: #{tpu_custom_call.1} parent=1 // pred_check_branch
      %27 = sbr.rel (0) target = $region9
    $region8: #{tpu_custom_call.1} parent=1 // pred_region
      %s29 = ssub.s32 4096, 4096
      %30 = vsyncadd [#allocation6], %s29
      %s31 = sshll.u32 [#allocation5], 4
      %s32 = int_to_ptr.vmem [resolvable:$true] %s31
      %37 = dma.hbm_to_vmem [thread:$0]  %s1, 4096, %s32, [#allocation6], 256, 256, 16
    $region9: #{tpu_custom_call.1} parent=1 // pred_fallthru
      _
    // Predicated region
    $region10: #{tpu_custom_call.1} parent=1 // pred_check
      _
    $region11: #{tpu_custom_call.1} parent=1 // pred_check_branch
      %39 = sbr.rel (0) target = $region13
    $region12: #{tpu_custom_call.1} parent=1 // pred_region
      %s41 = ssub.s32 64, 64
      %42 = vsyncadd [#allocation6], %s41
      %s44 = sshll.u32 [#allocation7], 4
      %s45 = int_to_ptr.vmem [resolvable:$true] %s44
      %47 = dma.hbm_to_vmem [thread:$0]  %s2, 64, %s45, [#allocation6]
    $region13: #{tpu_custom_call.1} parent=1 // pred_fallthru
      _
    // Predicated region
    $region14: #{tpu_custom_call.1} parent=1 // pred_check
      _
    $region15: #{tpu_custom_call.1} parent=1 // pred_check_branch
      %49 = sbr.rel (0) target = $region17
    $region16: #{tpu_custom_call.1} parent=1 // pred_region
      %s51 = ssub.s32 4096, 4096
      %52 = vsyncadd [#allocation9], %s51
      %s53 = sshll.u32 [#allocation8], 4
      %s54 = int_to_ptr.vmem [resolvable:$true] %s53
      %59 = dma.hbm_to_vmem [thread:$0]  %s3, 4096, %s54, [#allocation9], 64, 64, 4
    $region17: #{tpu_custom_call.1} parent=1 // pred_fallthru
      _
    // Predicated region
    $region18: #{tpu_custom_call.1} parent=1 // pred_check
      _
    $region19: #{tpu_custom_call.1} parent=1 // pred_check_branch
      %61 = sbr.rel (0) target = $region21
    $region20: #{tpu_custom_call.1} parent=1 // pred_region
      _
    $region21: #{tpu_custom_call.1} parent=1 // pred_fallthru
      _
    // Predicated region
    $region22: #{tpu_custom_call.1} parent=1 // pred_check
      _
    $region23: #{tpu_custom_call.1} parent=1 // pred_check_branch
      %63 = sbr.rel (0) target = $region25
    $region24: #{tpu_custom_call.1} parent=1 // pred_region
      %64 = dma.done [#allocation3], 512
    $region25: #{tpu_custom_call.1} parent=1 // pred_fallthru
      _
    // Predicated region
    $region26: #{tpu_custom_call.1} parent=1 // pred_check
      _
    $region27: #{tpu_custom_call.1} parent=1 // pred_check_branch
      %66 = sbr.rel (0) target = $region29
    $region28: #{tpu_custom_call.1} parent=1 // pred_region
      %67 = dma.done [#allocation6], 4096
    $region29: #{tpu_custom_call.1} parent=1 // pred_fallthru
      _
    // Predicated region
    $region30: #{tpu_custom_call.1} parent=1 // pred_check
      _
    $region31: #{tpu_custom_call.1} parent=1 // pred_check_branch
      %69 = sbr.rel (0) target = $region33
    $region32: #{tpu_custom_call.1} parent=1 // pred_region
      %70 = dma.done [#allocation6], 64
    $region33: #{tpu_custom_call.1} parent=1 // pred_fallthru
      _
    // Predicated region
    $region34: #{tpu_custom_call.1} parent=1 // pred_check
      _
    $region35: #{tpu_custom_call.1} parent=1 // pred_check_branch
      %72 = sbr.rel (0) target = $region37
    $region36: #{tpu_custom_call.1} parent=1 // pred_region
      %73 = dma.done [#allocation9], 4096
    $region37: #{tpu_custom_call.1} parent=1 // pred_fallthru
      _
    %v75 = vld [vmem:[#allocation2] sm:$0xff]
    %v76 = vld [vmem:[#allocation2 + $0x8] sm:$0xff]
    %v77 = vld [vmem:[#allocation2 + $0x10] sm:$0xff]
    %v78 = vld [vmem:[#allocation2 + $0x18] sm:$0xff]
    %v79 = vpack.c.bf16 %v76, %v75
    %v80 = vpack.c.bf16 %v78, %v77
    %v81 = vld [vmem:[#allocation5] sm:$0xff]
    %v82 = vld [vmem:[#allocation5 + $0x8] sm:$0xff]
    %v83 = vld [vmem:[#allocation5 + $0x10] sm:$0xff]
    %v84 = vld [vmem:[#allocation5 + $0x18] sm:$0xff]
    %v85 = vld [vmem:[#allocation5 + $0x20] sm:$0xff]
    %v86 = vld [vmem:[#allocation5 + $0x28] sm:$0xff]
    %v87 = vld [vmem:[#allocation5 + $0x30] sm:$0xff]
    %v88 = vld [vmem:[#allocation5 + $0x38] sm:$0xff]
    %v89 = vld [vmem:[#allocation5 + $0x40] sm:$0xff]
    %v90 = vld [vmem:[#allocation5 + $0x48] sm:$0xff]
    %v91 = vld [vmem:[#allocation5 + $0x50] sm:$0xff]
    %v92 = vld [vmem:[#allocation5 + $0x58] sm:$0xff]
    %v93 = vld [vmem:[#allocation5 + $0x60] sm:$0xff]
    %v94 = vld [vmem:[#allocation5 + $0x68] sm:$0xff]
    %v95 = vld [vmem:[#allocation5 + $0x70] sm:$0xff]
    %v96 = vld [vmem:[#allocation5 + $0x78] sm:$0xff]
    %v97 = vld [vmem:[#allocation5 + $0x80] sm:$0xff]
    %v98 = vld [vmem:[#allocation5 + $0x88] sm:$0xff]
    %v99 = vld [vmem:[#allocation5 + $0x90] sm:$0xff]
    %v100 = vld [vmem:[#allocation5 + $0x98] sm:$0xff]
    %v101 = vld [vmem:[#allocation5 + $0xa0] sm:$0xff]
    %v102 = vld [vmem:[#allocation5 + $0xa8] sm:$0xff]
    %v103 = vld [vmem:[#allocation5 + $0xb0] sm:$0xff]
    %v104 = vld [vmem:[#allocation5 + $0xb8] sm:$0xff]
    %v105 = vld [vmem:[#allocation5 + $0xc0] sm:$0xff]
    %v106 = vld [vmem:[#allocation5 + $0xc8] sm:$0xff]
    %v107 = vld [vmem:[#allocation5 + $0xd0] sm:$0xff]
    %v108 = vld [vmem:[#allocation5 + $0xd8] sm:$0xff]
    %v109 = vld [vmem:[#allocation5 + $0xe0] sm:$0xff]
    %v110 = vld [vmem:[#allocation5 + $0xe8] sm:$0xff]
    %v111 = vld [vmem:[#allocation5 + $0xf0] sm:$0xff]
    %v112 = vld [vmem:[#allocation5 + $0xf8] sm:$0xff]
    %v113 = vld [vmem:[#allocation7] sm:$0xf]
    %v115 = vlaneseq
    %v116 = vshrl.u32 %v115, 7
    %v117 = vsub.s32 0, %v116
    %v118 = vrot.slane %v113, %v117
    %v119 = vlaneseq
    %v120 = vshrl.u32 %v119, 7
    %v121 = vsub.s32 1, %v120
    %v122 = vrot.slane %v113, %v121
    %v123 = vlaneseq
    %v124 = vshrl.u32 %v123, 7
    %v125 = vsub.s32 2, %v124
    %v126 = vrot.slane %v113, %v125
    %v127 = vlaneseq
    %v128 = vshrl.u32 %v127, 7
    %v129 = vsub.s32 3, %v128
    %v130 = vrot.slane %v113, %v129
    %v167 = vunpack.c.l.b16 %v81
    %v168 = vunpack.c.h.b16 %v81
    %v169 = vunpack.c.l.b16 %v82
    %v170 = vunpack.c.h.b16 %v82
    %v171 = vunpack.c.l.b16 %v83
    %v172 = vunpack.c.h.b16 %v83
    %v173 = vunpack.c.l.b16 %v84
    %v174 = vunpack.c.h.b16 %v84
    %v175 = vunpack.c.l.b16 %v85
    %v176 = vunpack.c.h.b16 %v85
    %v177 = vunpack.c.l.b16 %v86
    %v178 = vunpack.c.h.b16 %v86
    %v179 = vunpack.c.l.b16 %v87
    %v180 = vunpack.c.h.b16 %v87
    %v181 = vunpack.c.l.b16 %v88
    %v182 = vunpack.c.h.b16 %v88
    %v183 = vunpack.c.l.b16 %v89
    %v184 = vunpack.c.h.b16 %v89
    %v185 = vunpack.c.l.b16 %v90
    %v186 = vunpack.c.h.b16 %v90
    %v187 = vunpack.c.l.b16 %v91
    %v188 = vunpack.c.h.b16 %v91
    %v189 = vunpack.c.l.b16 %v92
    %v190 = vunpack.c.h.b16 %v92
    %v191 = vunpack.c.l.b16 %v93
    %v192 = vunpack.c.h.b16 %v93
    %v193 = vunpack.c.l.b16 %v94
    %v194 = vunpack.c.h.b16 %v94
    %v195 = vunpack.c.l.b16 %v95
    %v196 = vunpack.c.h.b16 %v95
    %v197 = vunpack.c.l.b16 %v96
    %v198 = vunpack.c.h.b16 %v96
    %v199 = vunpack.c.l.b16 %v97
    %v200 = vunpack.c.h.b16 %v97
    %v201 = vunpack.c.l.b16 %v98
    %v202 = vunpack.c.h.b16 %v98
    %v203 = vunpack.c.l.b16 %v99
    %v204 = vunpack.c.h.b16 %v99
    %v205 = vunpack.c.l.b16 %v100
    %v206 = vunpack.c.h.b16 %v100
    %v207 = vunpack.c.l.b16 %v101
    %v208 = vunpack.c.h.b16 %v101
    %v209 = vunpack.c.l.b16 %v102
    %v210 = vunpack.c.h.b16 %v102
    %v211 = vunpack.c.l.b16 %v103
    %v212 = vunpack.c.h.b16 %v103
    %v213 = vunpack.c.l.b16 %v104
    %v214 = vunpack.c.h.b16 %v104
    %v215 = vunpack.c.l.b16 %v105
    %v216 = vunpack.c.h.b16 %v105
    %v217 = vunpack.c.l.b16 %v106
    %v218 = vunpack.c.h.b16 %v106
    %v219 = vunpack.c.l.b16 %v107
    %v220 = vunpack.c.h.b16 %v107
    %v221 = vunpack.c.l.b16 %v108
    %v222 = vunpack.c.h.b16 %v108
    %v223 = vunpack.c.l.b16 %v109
    %v224 = vunpack.c.h.b16 %v109
    %v225 = vunpack.c.l.b16 %v110
    %v226 = vunpack.c.h.b16 %v110
    %v227 = vunpack.c.l.b16 %v111
    %v228 = vunpack.c.h.b16 %v111
    %v229 = vunpack.c.l.b16 %v112
    %v230 = vunpack.c.h.b16 %v112
    %v231 = vpack.c.b16 %v171, %v167
    %v232 = vpack.c.b16 %v172, %v168
    %v233 = vpack.c.b16 %v173, %v169
    %v234 = vpack.c.b16 %v174, %v170
    %v235 = vpack.c.b16 %v179, %v175
    %v236 = vpack.c.b16 %v180, %v176
    %v237 = vpack.c.b16 %v181, %v177
    %v238 = vpack.c.b16 %v182, %v178
    %v239 = vpack.c.b16 %v187, %v183
    %v240 = vpack.c.b16 %v188, %v184
    %v241 = vpack.c.b16 %v189, %v185
    %v242 = vpack.c.b16 %v190, %v186
    %v243 = vpack.c.b16 %v195, %v191
    %v244 = vpack.c.b16 %v196, %v192
    %v245 = vpack.c.b16 %v197, %v193
    %v246 = vpack.c.b16 %v198, %v194
    %v247 = vpack.c.b16 %v203, %v199
    %v248 = vpack.c.b16 %v204, %v200
    %v249 = vpack.c.b16 %v205, %v201
    %v250 = vpack.c.b16 %v206, %v202
    %v251 = vpack.c.b16 %v211, %v207
    %v252 = vpack.c.b16 %v212, %v208
    %v253 = vpack.c.b16 %v213, %v209
    %v254 = vpack.c.b16 %v214, %v210
    %v255 = vpack.c.b16 %v219, %v215
    %v256 = vpack.c.b16 %v220, %v216
    %v257 = vpack.c.b16 %v221, %v217
    %v258 = vpack.c.b16 %v222, %v218
    %v259 = vpack.c.b16 %v227, %v223
    %v260 = vpack.c.b16 %v228, %v224
    %v261 = vpack.c.b16 %v229, %v225
    %v262 = vpack.c.b16 %v230, %v226
    %295 = vmatprep.subr.bf16.mxu0 %v260
    %296 = vmatpush1.bf16.msra.mxu0 %v259
    %297 = vmatprep.subr.bf16.mxu0 %v256
    %298 = vmatpush1.bf16.msra.mxu0 %v255
    %299 = vmatprep.subr.bf16.mxu0 %v252
    %300 = vmatpush1.bf16.msra.mxu0 %v251
    %301 = vmatprep.subr.bf16.mxu0 %v248
    %302 = vmatpush1.bf16.msra.mxu0 %v247
    %303 = vmatprep.subr.bf16.mxu0 %v244
    %304 = vmatpush1.bf16.msra.mxu0 %v243
    %305 = vmatprep.subr.bf16.mxu0 %v240
    %306 = vmatpush1.bf16.msra.mxu0 %v239
    %307 = vmatprep.subr.bf16.mxu0 %v236
    %308 = vmatpush1.bf16.msra.mxu0 %v235
    %309 = vmatprep.subr.bf16.mxu0 %v232
    %310 = vmatpush1.bf16.msra.mxu0 %v231
    %311 = vmatprep.subr.bf16.mxu0 0
    %312 = vmatpush2.bf16.msra.mxu0 0
    %313 = vmatprep.subr.bf16.mxu0 0
    %314 = vmatpush2.bf16.msra.mxu0 0
    %315 = vmatprep.subr.bf16.mxu0 0
    %316 = vmatpush2.bf16.msra.mxu0 0
    %317 = vmatprep.subr.bf16.mxu0 0
    %318 = vmatpush2.bf16.msra.mxu0 0
    %319 = vmatprep.subr.bf16.mxu0 0
    %320 = vmatpush2.bf16.msra.mxu0 0
    %321 = vmatprep.subr.bf16.mxu0 0
    %322 = vmatpush2.bf16.msra.mxu0 0
    %323 = vmatprep.subr.bf16.mxu0 0
    %324 = vmatpush2.bf16.msra.mxu0 0
    %325 = vmatprep.subr.bf16.mxu0 0
    %326 = vmatpush2.bf16.msra.mxu0 0
    %327 = vmatprep.mubr.bf16.mxu0 0
    %328 = vmatmul.mubr.bf16.gmra.mxu0 %v79
    %v329 = vpop.f32.mrf.mxu0
    %v330 = vadd.f32 %v118, %v329
    %v331 = vpop.f32.mrf.mxu0
    %v332 = vadd.f32 %v122, %v331
    %v333 = vpop.f32.mrf.mxu0
    %v334 = vadd.f32 %v118, %v333
    %v335 = vpop.f32.mrf.mxu0
    %v336 = vadd.f32 %v122, %v335
    %337 = vmatprep.mubr.bf16.mxu0 0
    %338 = vmatmul.mubr.bf16.gmra.mxu0 %v80
    %v339 = vpop.f32.mrf.mxu0
    %v340 = vadd.f32 %v118, %v339
    %v341 = vpop.f32.mrf.mxu0
    %v342 = vadd.f32 %v122, %v341
    %v343 = vpop.f32.mrf.mxu0
    %v344 = vadd.f32 %v118, %v343
    %v345 = vpop.f32.mrf.mxu0
    %v346 = vadd.f32 %v122, %v345
    %347 = vdwg.mxu0
    %348 = vmatprep.subr.bf16.mxu0 %v262
    %349 = vmatpush1.bf16.msra.mxu0 %v261
    %350 = vmatprep.subr.bf16.mxu0 %v258
    %351 = vmatpush1.bf16.msra.mxu0 %v257
    %352 = vmatprep.subr.bf16.mxu0 %v254
    %353 = vmatpush1.bf16.msra.mxu0 %v253
    %354 = vmatprep.subr.bf16.mxu0 %v250
    %355 = vmatpush1.bf16.msra.mxu0 %v249
    %356 = vmatprep.subr.bf16.mxu0 %v246
    %357 = vmatpush1.bf16.msra.mxu0 %v245
    %358 = vmatprep.subr.bf16.mxu0 %v242
    %359 = vmatpush1.bf16.msra.mxu0 %v241
    %360 = vmatprep.subr.bf16.mxu0 %v238
    %361 = vmatpush1.bf16.msra.mxu0 %v237
    %362 = vmatprep.subr.bf16.mxu0 %v234
    %363 = vmatpush1.bf16.msra.mxu0 %v233
    %364 = vmatprep.subr.bf16.mxu0 0
    %365 = vmatpush2.bf16.msra.mxu0 0
    %366 = vmatprep.subr.bf16.mxu0 0
    %367 = vmatpush2.bf16.msra.mxu0 0
    %368 = vmatprep.subr.bf16.mxu0 0
    %369 = vmatpush2.bf16.msra.mxu0 0
    %370 = vmatprep.subr.bf16.mxu0 0
    %371 = vmatpush2.bf16.msra.mxu0 0
    %372 = vmatprep.subr.bf16.mxu0 0
    %373 = vmatpush2.bf16.msra.mxu0 0
    %374 = vmatprep.subr.bf16.mxu0 0
    %375 = vmatpush2.bf16.msra.mxu0 0
    %376 = vmatprep.subr.bf16.mxu0 0
    %377 = vmatpush2.bf16.msra.mxu0 0
    %378 = vmatprep.subr.bf16.mxu0 0
    %379 = vmatpush2.bf16.msra.mxu0 0
    %380 = vmatprep.mubr.bf16.mxu0 0
    %381 = vmatmul.mubr.bf16.gmra.mxu0 %v79
    %v382 = vpop.f32.mrf.mxu0
    %v383 = vadd.f32 %v126, %v382
    %v384 = vpop.f32.mrf.mxu0
    %v385 = vadd.f32 %v130, %v384
    %v386 = vpop.f32.mrf.mxu0
    %v387 = vadd.f32 %v126, %v386
    %v388 = vpop.f32.mrf.mxu0
    %v389 = vadd.f32 %v130, %v388
    %390 = vmatprep.mubr.bf16.mxu0 0
    %391 = vmatmul.mubr.bf16.gmra.mxu0 %v80
    %v392 = vpop.f32.mrf.mxu0
    %v393 = vadd.f32 %v126, %v392
    %v394 = vpop.f32.mrf.mxu0
    %v395 = vadd.f32 %v130, %v394
    %v396 = vpop.f32.mrf.mxu0
    %v397 = vadd.f32 %v126, %v396
    %v398 = vpop.f32.mrf.mxu0
    %v399 = vadd.f32 %v130, %v398
    %400 = vdwg.mxu0
    %v401 = vsub.f32 0.0, %v330
    %v402 = vsub.f32 0.0, %v332
    %v403 = vsub.f32 0.0, %v383
    %v404 = vsub.f32 0.0, %v385
    %v405 = vsub.f32 0.0, %v334
    %v406 = vsub.f32 0.0, %v336
    %v407 = vsub.f32 0.0, %v387
    %v408 = vsub.f32 0.0, %v389
    %v409 = vsub.f32 0.0, %v340
    %v410 = vsub.f32 0.0, %v342
    %v411 = vsub.f32 0.0, %v393
    %v412 = vsub.f32 0.0, %v395
    %v413 = vsub.f32 0.0, %v344
    %v414 = vsub.f32 0.0, %v346
    %v415 = vsub.f32 0.0, %v397
    %v416 = vsub.f32 0.0, %v399
    %v417 = vmul.f32 %v401, 1.442695
    %v418 = vpow.pop %v417
    %v419 = vmul.f32 %v402, 1.442695
    %v420 = vpow.pop %v419
    %v421 = vmul.f32 %v403, 1.442695
    %v422 = vpow.pop %v421
    %v423 = vmul.f32 %v404, 1.442695
    %v424 = vpow.pop %v423
    %v425 = vmul.f32 %v405, 1.442695
    %v426 = vpow.pop %v425
    %v427 = vmul.f32 %v406, 1.442695
    %v428 = vpow.pop %v427
    %v429 = vmul.f32 %v407, 1.442695
    %v430 = vpow.pop %v429
    %v431 = vmul.f32 %v408, 1.442695
    %v432 = vpow.pop %v431
    %v433 = vmul.f32 %v409, 1.442695
    %v434 = vpow.pop %v433
    %v435 = vmul.f32 %v410, 1.442695
    %v436 = vpow.pop %v435
    %v437 = vmul.f32 %v411, 1.442695
    %v438 = vpow.pop %v437
    %v439 = vmul.f32 %v412, 1.442695
    %v440 = vpow.pop %v439
    %v441 = vmul.f32 %v413, 1.442695
    %v442 = vpow.pop %v441
    %v443 = vmul.f32 %v414, 1.442695
    %v444 = vpow.pop %v443
    %v445 = vmul.f32 %v415, 1.442695
    %v446 = vpow.pop %v445
    %v447 = vmul.f32 %v416, 1.442695
    %v448 = vpow.pop %v447
    %v449 = vadd.f32 %v418, 1.0
    %v450 = vadd.f32 %v420, 1.0
    %v451 = vadd.f32 %v422, 1.0
    %v452 = vadd.f32 %v424, 1.0
    %v453 = vadd.f32 %v426, 1.0
    %v454 = vadd.f32 %v428, 1.0
    %v455 = vadd.f32 %v430, 1.0
    %v456 = vadd.f32 %v432, 1.0
    %v457 = vadd.f32 %v434, 1.0
    %v458 = vadd.f32 %v436, 1.0
    %v459 = vadd.f32 %v438, 1.0
    %v460 = vadd.f32 %v440, 1.0
    %v461 = vadd.f32 %v442, 1.0
    %v462 = vadd.f32 %v444, 1.0
    %v463 = vadd.f32 %v446, 1.0
    %v464 = vadd.f32 %v448, 1.0
    %v465 = vrcp.pop %v449
    %v466 = vrcp.pop %v450
    %v467 = vrcp.pop %v451
    %v468 = vrcp.pop %v452
    %v469 = vrcp.pop %v453
    %v470 = vrcp.pop %v454
    %v471 = vrcp.pop %v455
    %v472 = vrcp.pop %v456
    %v473 = vrcp.pop %v457
    %v474 = vrcp.pop %v458
    %v475 = vrcp.pop %v459
    %v476 = vrcp.pop %v460
    %v477 = vrcp.pop %v461
    %v478 = vrcp.pop %v462
    %v479 = vrcp.pop %v463
    %v480 = vrcp.pop %v464
    %v481 = vmul.f32 %v330, %v465
    %v482 = vmul.f32 %v332, %v466
    %v483 = vmul.f32 %v383, %v467
    %v484 = vmul.f32 %v385, %v468
    %v485 = vmul.f32 %v334, %v469
    %v486 = vmul.f32 %v336, %v470
    %v487 = vmul.f32 %v387, %v471
    %v488 = vmul.f32 %v389, %v472
    %v489 = vmul.f32 %v340, %v473
    %v490 = vmul.f32 %v342, %v474
    %v491 = vmul.f32 %v393, %v475
    %v492 = vmul.f32 %v395, %v476
    %v493 = vmul.f32 %v344, %v477
    %v494 = vmul.f32 %v346, %v478
    %v495 = vmul.f32 %v397, %v479
    %v496 = vmul.f32 %v399, %v480
    %v497 = vpack.c.bf16 %v485, %v481
    %v498 = vpack.c.bf16 %v486, %v482
    %v499 = vpack.c.bf16 %v487, %v483
    %v500 = vpack.c.bf16 %v488, %v484
    %v501 = vpack.c.bf16 %v493, %v489
    %v502 = vpack.c.bf16 %v494, %v490
    %v503 = vpack.c.bf16 %v495, %v491
    %v504 = vpack.c.bf16 %v496, %v492
    %v505 = vld [vmem:[#allocation8] sm:$0xf]
    %v506 = vld [vmem:[#allocation8 + $0x4] sm:$0xf]
    %v507 = vld [vmem:[#allocation8 + $0x8] sm:$0xf]
    %v508 = vld [vmem:[#allocation8 + $0xc] sm:$0xf]
    %v509 = vld [vmem:[#allocation8 + $0x10] sm:$0xf]
    %v510 = vld [vmem:[#allocation8 + $0x14] sm:$0xf]
    %v511 = vld [vmem:[#allocation8 + $0x18] sm:$0xf]
    %v512 = vld [vmem:[#allocation8 + $0x1c] sm:$0xf]
    %v513 = vld [vmem:[#allocation8 + $0x20] sm:$0xf]
    %v514 = vld [vmem:[#allocation8 + $0x24] sm:$0xf]
    %v515 = vld [vmem:[#allocation8 + $0x28] sm:$0xf]
    %v516 = vld [vmem:[#allocation8 + $0x2c] sm:$0xf]
    %v517 = vld [vmem:[#allocation8 + $0x30] sm:$0xf]
    %v518 = vld [vmem:[#allocation8 + $0x34] sm:$0xf]
    %v519 = vld [vmem:[#allocation8 + $0x38] sm:$0xf]
    %v520 = vld [vmem:[#allocation8 + $0x3c] sm:$0xf]
    %v521 = vld [vmem:[#allocation8 + $0x40] sm:$0xf]
    %v522 = vld [vmem:[#allocation8 + $0x44] sm:$0xf]
    %v523 = vld [vmem:[#allocation8 + $0x48] sm:$0xf]
    %v524 = vld [vmem:[#allocation8 + $0x4c] sm:$0xf]
    %v525 = vld [vmem:[#allocation8 + $0x50] sm:$0xf]
    %v526 = vld [vmem:[#allocation8 + $0x54] sm:$0xf]
    %v527 = vld [vmem:[#allocation8 + $0x58] sm:$0xf]
    %v528 = vld [vmem:[#allocation8 + $0x5c] sm:$0xf]
    %v529 = vld [vmem:[#allocation8 + $0x60] sm:$0xf]
    %v530 = vld [vmem:[#allocation8 + $0x64] sm:$0xf]
    %v531 = vld [vmem:[#allocation8 + $0x68] sm:$0xf]
    %v532 = vld [vmem:[#allocation8 + $0x6c] sm:$0xf]
    %v533 = vld [vmem:[#allocation8 + $0x70] sm:$0xf]
    %v534 = vld [vmem:[#allocation8 + $0x74] sm:$0xf]
    %v535 = vld [vmem:[#allocation8 + $0x78] sm:$0xf]
    %v536 = vld [vmem:[#allocation8 + $0x7c] sm:$0xf]
    %v537 = vld [vmem:[#allocation8 + $0x80] sm:$0xf]
    %v538 = vld [vmem:[#allocation8 + $0x84] sm:$0xf]
    %v539 = vld [vmem:[#allocation8 + $0x88] sm:$0xf]
    %v540 = vld [vmem:[#allocation8 + $0x8c] sm:$0xf]
    %v541 = vld [vmem:[#allocation8 + $0x90] sm:$0xf]
    %v542 = vld [vmem:[#allocation8 + $0x94] sm:$0xf]
    %v543 = vld [vmem:[#allocation8 + $0x98] sm:$0xf]
    %v544 = vld [vmem:[#allocation8 + $0x9c] sm:$0xf]
    %v545 = vld [vmem:[#allocation8 + $0xa0] sm:$0xf]
    %v546 = vld [vmem:[#allocation8 + $0xa4] sm:$0xf]
    %v547 = vld [vmem:[#allocation8 + $0xa8] sm:$0xf]
    %v548 = vld [vmem:[#allocation8 + $0xac] sm:$0xf]
    %v549 = vld [vmem:[#allocation8 + $0xb0] sm:$0xf]
    %v550 = vld [vmem:[#allocation8 + $0xb4] sm:$0xf]
    %v551 = vld [vmem:[#allocation8 + $0xb8] sm:$0xf]
    %v552 = vld [vmem:[#allocation8 + $0xbc] sm:$0xf]
    %v553 = vld [vmem:[#allocation8 + $0xc0] sm:$0xf]
    %v554 = vld [vmem:[#allocation8 + $0xc4] sm:$0xf]
    %v555 = vld [vmem:[#allocation8 + $0xc8] sm:$0xf]
    %v556 = vld [vmem:[#allocation8 + $0xcc] sm:$0xf]
    %v557 = vld [vmem:[#allocation8 + $0xd0] sm:$0xf]
    %v558 = vld [vmem:[#allocation8 + $0xd4] sm:$0xf]
    %v559 = vld [vmem:[#allocation8 + $0xd8] sm:$0xf]
    %v560 = vld [vmem:[#allocation8 + $0xdc] sm:$0xf]
    %v561 = vld [vmem:[#allocation8 + $0xe0] sm:$0xf]
    %v562 = vld [vmem:[#allocation8 + $0xe4] sm:$0xf]
    %v563 = vld [vmem:[#allocation8 + $0xe8] sm:$0xf]
    %v564 = vld [vmem:[#allocation8 + $0xec] sm:$0xf]
    %v565 = vld [vmem:[#allocation8 + $0xf0] sm:$0xf]
    %v566 = vld [vmem:[#allocation8 + $0xf4] sm:$0xf]
    %v567 = vld [vmem:[#allocation8 + $0xf8] sm:$0xf]
    %v568 = vld [vmem:[#allocation8 + $0xfc] sm:$0xf]
    %v569 = vld [vmem:[%s4] sm:$0x1]
    %v571 = vlaneseq
    %v572 = vshrl.u32 %v571, 7
    %v573 = vsub.s32 0, %v572
    %v574 = vrot.slane %v569, %v573
    %v640 = vunpack.c.l.b16 %v505
    %v641 = vunpack.c.l.b16 %v506
    %v642 = vunpack.c.l.b16 %v507
    %v643 = vunpack.c.l.b16 %v508
    %v644 = vunpack.c.l.b16 %v509
    %v645 = vunpack.c.l.b16 %v510
    %v646 = vunpack.c.l.b16 %v511
    %v647 = vunpack.c.l.b16 %v512
    %v648 = vunpack.c.l.b16 %v513
    %v649 = vunpack.c.l.b16 %v514
    %v650 = vunpack.c.l.b16 %v515
    %v651 = vunpack.c.l.b16 %v516
    %v652 = vunpack.c.l.b16 %v517
    %v653 = vunpack.c.l.b16 %v518
    %v654 = vunpack.c.l.b16 %v519
    %v655 = vunpack.c.l.b16 %v520
    %v656 = vunpack.c.l.b16 %v521
    %v657 = vunpack.c.l.b16 %v522
    %v658 = vunpack.c.l.b16 %v523
    %v659 = vunpack.c.l.b16 %v524
    %v660 = vunpack.c.l.b16 %v525
    %v661 = vunpack.c.l.b16 %v526
    %v662 = vunpack.c.l.b16 %v527
    %v663 = vunpack.c.l.b16 %v528
    %v664 = vunpack.c.l.b16 %v529
    %v665 = vunpack.c.l.b16 %v530
    %v666 = vunpack.c.l.b16 %v531
    %v667 = vunpack.c.l.b16 %v532
    %v668 = vunpack.c.l.b16 %v533
    %v669 = vunpack.c.l.b16 %v534
    %v670 = vunpack.c.l.b16 %v535
    %v671 = vunpack.c.l.b16 %v536
    %v672 = vunpack.c.l.b16 %v537
    %v673 = vunpack.c.l.b16 %v538
    %v674 = vunpack.c.l.b16 %v539
    %v675 = vunpack.c.l.b16 %v540
    %v676 = vunpack.c.l.b16 %v541
    %v677 = vunpack.c.l.b16 %v542
    %v678 = vunpack.c.l.b16 %v543
    %v679 = vunpack.c.l.b16 %v544
    %v680 = vunpack.c.l.b16 %v545
    %v681 = vunpack.c.l.b16 %v546
    %v682 = vunpack.c.l.b16 %v547
    %v683 = vunpack.c.l.b16 %v548
    %v684 = vunpack.c.l.b16 %v549
    %v685 = vunpack.c.l.b16 %v550
    %v686 = vunpack.c.l.b16 %v551
    %v687 = vunpack.c.l.b16 %v552
    %v688 = vunpack.c.l.b16 %v553
    %v689 = vunpack.c.l.b16 %v554
    %v690 = vunpack.c.l.b16 %v555
    %v691 = vunpack.c.l.b16 %v556
    %v692 = vunpack.c.l.b16 %v557
    %v693 = vunpack.c.l.b16 %v558
    %v694 = vunpack.c.l.b16 %v559
    %v695 = vunpack.c.l.b16 %v560
    %v696 = vunpack.c.l.b16 %v561
    %v697 = vunpack.c.l.b16 %v562
    %v698 = vunpack.c.l.b16 %v563
    %v699 = vunpack.c.l.b16 %v564
    %v700 = vunpack.c.l.b16 %v565
    %v701 = vunpack.c.l.b16 %v566
    %v702 = vunpack.c.l.b16 %v567
    %v703 = vunpack.c.l.b16 %v568
    %v704 = vpack.c.b16 %v641, %v640
    %v705 = vpack.c.b16 %v643, %v642
    %v706 = vpack.c.b16 %v645, %v644
    %v707 = vpack.c.b16 %v647, %v646
    %v708 = vpack.c.b16 %v649, %v648
    %v709 = vpack.c.b16 %v651, %v650
    %v710 = vpack.c.b16 %v653, %v652
    %v711 = vpack.c.b16 %v655, %v654
    %v712 = vpack.c.b16 %v657, %v656
    %v713 = vpack.c.b16 %v659, %v658
    %v714 = vpack.c.b16 %v661, %v660
    %v715 = vpack.c.b16 %v663, %v662
    %v716 = vpack.c.b16 %v665, %v664
    %v717 = vpack.c.b16 %v667, %v666
    %v718 = vpack.c.b16 %v669, %v668
    %v719 = vpack.c.b16 %v671, %v670
    %v720 = vpack.c.b16 %v673, %v672
    %v721 = vpack.c.b16 %v675, %v674
    %v722 = vpack.c.b16 %v677, %v676
    %v723 = vpack.c.b16 %v679, %v678
    %v724 = vpack.c.b16 %v681, %v680
    %v725 = vpack.c.b16 %v683, %v682
    %v726 = vpack.c.b16 %v685, %v684
    %v727 = vpack.c.b16 %v687, %v686
    %v728 = vpack.c.b16 %v689, %v688
    %v729 = vpack.c.b16 %v691, %v690
    %v730 = vpack.c.b16 %v693, %v692
    %v731 = vpack.c.b16 %v695, %v694
    %v732 = vpack.c.b16 %v697, %v696
    %v733 = vpack.c.b16 %v699, %v698
    %v734 = vpack.c.b16 %v701, %v700
    %v735 = vpack.c.b16 %v703, %v702
    %768 = vmatprep.subr.bf16.mxu0 0
    %769 = vmatpush1.bf16.msra.mxu0 %v711
    %770 = vmatprep.subr.bf16.mxu0 0
    %771 = vmatpush1.bf16.msra.mxu0 %v710
    %772 = vmatprep.subr.bf16.mxu0 0
    %773 = vmatpush1.bf16.msra.mxu0 %v709
    %774 = vmatprep.subr.bf16.mxu0 0
    %775 = vmatpush1.bf16.msra.mxu0 %v708
    %776 = vmatprep.subr.bf16.mxu0 0
    %777 = vmatpush1.bf16.msra.mxu0 %v707
    %778 = vmatprep.subr.bf16.mxu0 0
    %779 = vmatpush1.bf16.msra.mxu0 %v706
    %780 = vmatprep.subr.bf16.mxu0 0
    %781 = vmatpush1.bf16.msra.mxu0 %v705
    %782 = vmatprep.subr.bf16.mxu0 0
    %783 = vmatpush1.bf16.msra.mxu0 %v704
    %784 = vmatprep.subr.bf16.mxu0 0
    %785 = vmatpush2.bf16.msra.mxu0 %v719
    %786 = vmatprep.subr.bf16.mxu0 0
    %787 = vmatpush2.bf16.msra.mxu0 %v718
    %788 = vmatprep.subr.bf16.mxu0 0
    %789 = vmatpush2.bf16.msra.mxu0 %v717
    %790 = vmatprep.subr.bf16.mxu0 0
    %791 = vmatpush2.bf16.msra.mxu0 %v716
    %792 = vmatprep.subr.bf16.mxu0 0
    %793 = vmatpush2.bf16.msra.mxu0 %v715
    %794 = vmatprep.subr.bf16.mxu0 0
    %795 = vmatpush2.bf16.msra.mxu0 %v714
    %796 = vmatprep.subr.bf16.mxu0 0
    %797 = vmatpush2.bf16.msra.mxu0 %v713
    %798 = vmatprep.subr.bf16.mxu0 0
    %799 = vmatpush2.bf16.msra.mxu0 %v712
    %800 = vmatprep.mubr.bf16.mxu0 %v498
    %801 = vmatmul.mubr.bf16.gmra.mxu0 %v497
    %v802 = vpop.f32.mrf.mxu0
    %v803 = vadd.f32 %v574, %v802
    %v804 = vpop.f32.mrf.mxu0
    %v805 = vpop.f32.mrf.mxu0
    %v806 = vadd.f32 %v574, %v805
    %v807 = vpop.f32.mrf.mxu0
    %808 = vmatprep.mubr.bf16.mxu0 %v502
    %809 = vmatmul.mubr.bf16.gmra.mxu0 %v501
    %v810 = vpop.f32.mrf.mxu0
    %v811 = vadd.f32 %v574, %v810
    %v812 = vpop.f32.mrf.mxu0
    %v813 = vpop.f32.mrf.mxu0
    %v814 = vadd.f32 %v574, %v813
    %v815 = vpop.f32.mrf.mxu0
    %816 = vdwg.mxu0
    %817 = vmatprep.subr.bf16.mxu0 0
    %818 = vmatpush1.bf16.msra.mxu0 %v727
    %819 = vmatprep.subr.bf16.mxu0 0
    %820 = vmatpush1.bf16.msra.mxu0 %v726
    %821 = vmatprep.subr.bf16.mxu0 0
    %822 = vmatpush1.bf16.msra.mxu0 %v725
    %823 = vmatprep.subr.bf16.mxu0 0
    %824 = vmatpush1.bf16.msra.mxu0 %v724
    %825 = vmatprep.subr.bf16.mxu0 0
    %826 = vmatpush1.bf16.msra.mxu0 %v723
    %827 = vmatprep.subr.bf16.mxu0 0
    %828 = vmatpush1.bf16.msra.mxu0 %v722
    %829 = vmatprep.subr.bf16.mxu0 0
    %830 = vmatpush1.bf16.msra.mxu0 %v721
    %831 = vmatprep.subr.bf16.mxu0 0
    %832 = vmatpush1.bf16.msra.mxu0 %v720
    %833 = vmatprep.subr.bf16.mxu0 0
    %834 = vmatpush2.bf16.msra.mxu0 %v735
    %835 = vmatprep.subr.bf16.mxu0 0
    %836 = vmatpush2.bf16.msra.mxu0 %v734
    %837 = vmatprep.subr.bf16.mxu0 0
    %838 = vmatpush2.bf16.msra.mxu0 %v733
    %839 = vmatprep.subr.bf16.mxu0 0
    %840 = vmatpush2.bf16.msra.mxu0 %v732
    %841 = vmatprep.subr.bf16.mxu0 0
    %842 = vmatpush2.bf16.msra.mxu0 %v731
    %843 = vmatprep.subr.bf16.mxu0 0
    %844 = vmatpush2.bf16.msra.mxu0 %v730
    %845 = vmatprep.subr.bf16.mxu0 0
    %846 = vmatpush2.bf16.msra.mxu0 %v729
    %847 = vmatprep.subr.bf16.mxu0 0
    %848 = vmatpush2.bf16.msra.mxu0 %v728
    %849 = vmatprep.mubr.bf16.mxu0 %v500
    %850 = vmatmul.mubr.bf16.gmra.mxu0 %v499
    %v851 = vpop.f32.mrf.mxu0
    %v852 = vadd.f32 %v803, %v851
    %v853 = vpop.f32.mrf.mxu0
    %v854 = vpop.f32.mrf.mxu0
    %v855 = vadd.f32 %v806, %v854
    %v856 = vpop.f32.mrf.mxu0
    %857 = vmatprep.mubr.bf16.mxu0 %v504
    %858 = vmatmul.mubr.bf16.gmra.mxu0 %v503
    %v859 = vpop.f32.mrf.mxu0
    %v860 = vadd.f32 %v811, %v859
    %v861 = vpop.f32.mrf.mxu0
    %v862 = vpop.f32.mrf.mxu0
    %v863 = vadd.f32 %v814, %v862
    %v864 = vpop.f32.mrf.mxu0
    %865 = vdwg.mxu0
    %v866 = vsub.f32 0.0, %v852
    %v867 = vsub.f32 0.0, %v855
    %v868 = vsub.f32 0.0, %v860
    %v869 = vsub.f32 0.0, %v863
    %v870 = vmul.f32 %v866, 1.442695
    %v871 = vpow.pop %v870
    %v872 = vmul.f32 %v867, 1.442695
    %v873 = vpow.pop %v872
    %v874 = vmul.f32 %v868, 1.442695
    %v875 = vpow.pop %v874
    %v876 = vmul.f32 %v869, 1.442695
    %v877 = vpow.pop %v876
    %v878 = vadd.f32 %v871, 1.0
    %v879 = vadd.f32 %v873, 1.0
    %v880 = vadd.f32 %v875, 1.0
    %v881 = vadd.f32 %v877, 1.0
    %v882 = vrcp.pop %v878
    %v883 = vrcp.pop %v879
    %v884 = vrcp.pop %v880
    %v885 = vrcp.pop %v881
    %v886 = vmul.f32 %v852, %v882
    %v887 = vmul.f32 %v855, %v883
    %v888 = vmul.f32 %v860, %v884
    %v889 = vmul.f32 %v863, %v885
    %890 = vst [vmem:[#allocation10] sm:$0xff] %v886
    %891 = vst [vmem:[#allocation10 + $0x8] sm:$0xff] %v887
    %892 = vst [vmem:[#allocation10 + $0x10] sm:$0xff] %v888
    %893 = vst [vmem:[#allocation10 + $0x18] sm:$0xff] %v889
    // Predicated region
    $region38: #{tpu_custom_call.1} parent=1 // pred_check
      _
    $region39: #{tpu_custom_call.1} parent=1 // pred_check_branch
      %895 = sbr.rel (0) target = $region41
    $region40: #{tpu_custom_call.1} parent=1 // pred_region
      %s897 = ssub.s32 512, 512
      %898 = vsyncadd [#allocation4], %s897
      %s899 = sshll.u32 [#allocation10], 4
      %s900 = int_to_ptr.vmem [resolvable:$true] %s899
      %905 = dma.vmem_to_hbm [thread:$0]  %s900, 512, %s5, [#allocation4], 128, 128, 8
    $region41: #{tpu_custom_call.1} parent=1 // pred_fallthru
      _
    // Predicated region
    $region42: #{tpu_custom_call.1} parent=1 // pred_check
      _
    $region43: #{tpu_custom_call.1} parent=1 // pred_check_branch
      %907 = sbr.rel (0) target = $region45
    $region44: #{tpu_custom_call.1} parent=1 // pred_region
      %908 = dma.done [#allocation4], 512
    $region45: #{tpu_custom_call.1} parent=1 // pred_fallthru
      _
    %909 = vsyncpa [#allocation3], 1
    %910 = vsyncpa [#allocation6], 1
    %911 = vsyncpa [#allocation9], 1
    %912 = vsyncpa [#allocation4], 1

</llo_original>
